<compile_context>
chip_gen: v5e
topology: v5e:2x2
jax: 0.10.0
libtpu: 0.0.40
codegen_flags: <defaults>
</compile_context>

<pallas_src>
import functools

import jax
import jax.numpy as jnp
from jax.experimental import pallas as pl
from jax.experimental.pallas import tpu as pltpu


def eca_kernel(w_ref, x_ref, o_ref, mpad_ref, *, ks: int, t_true: int):
    # w_ref:    (ks,) f32 in SMEM           — flattened Conv1d weight (1, 1, ks)
    # x_ref:    (C, Tp) in VMEM             — one batch element (batch dim squeezed)
    # o_ref:    (C, Tp) in VMEM
    # mpad_ref: (C + 2*pad, 1) f32 VMEM scratch — zero-padded conv input
    pad = (ks - 1) // 2
    C = x_ref.shape[0]

    # 1) Channel means over the *true* time length (padded tail of x is zero),
    #    accumulated in f32 without materializing an f32 copy of the block.
    m = jnp.sum(x_ref[...], axis=-1, keepdims=True, dtype=jnp.float32) * (1.0 / t_true)

    # 2) Conv1d over the channel axis, 'same' zero padding (odd kernel size).
    #    Write the means into a zero-padded scratch and take ks static slices.
    mpad_ref[...] = jnp.zeros_like(mpad_ref)
    mpad_ref[pl.ds(pad, C), :] = m                      # mpad[pad:pad+C] = m

    acc = jnp.zeros((C, 1), jnp.float32)
    for k in range(ks):                                  # static unroll over taps
        acc = acc + w_ref[k] * mpad_ref[pl.ds(k, C), :]  # y[i] += w[k]*m[i+k-pad]

    # 3) Sigmoid gate (f32, O(C) only), scale the block in its native dtype.
    scale = jax.nn.sigmoid(acc)                          # (C, 1) f32
    o_ref[...] = x_ref[...] * scale.astype(o_ref.dtype)  # lane-broadcast over T


def eca_forward(x, w):
    """x: (B, C, T), w: (ks,) Conv1d(1,1,ks,bias=False) taps -> (B, C, T)."""
    B, C, T = x.shape
    ks = int(w.shape[0])
    pad = (ks - 1) // 2

    # Lane-dense output: if T < 128 every store would be a masked partial
    # store; pad T up to 128 (zeros do not perturb the mean, we divide by the
    # true T, and the padded output columns are sliced away).
    Tp = T if T >= 128 else 128
    xp = x if Tp == T else jnp.pad(x, ((0, 0), (0, 0), (0, Tp - T)))

    itemsize = jnp.dtype(x.dtype).itemsize
    block_bytes = C * Tp * itemsize
    # in + out, double-buffered, plus scratch/compiler headroom; safe on 64 MiB v7x.
    vmem_limit = int(min(max(6 * block_bytes + (4 << 20), 8 << 20), 100 << 20))

    out = pl.pallas_call(
        functools.partial(eca_kernel, ks=ks, t_true=T),
        out_shape=jax.ShapeDtypeStruct((B, C, Tp), x.dtype),
        grid_spec=pltpu.PrefetchScalarGridSpec(
            num_scalar_prefetch=0,
            grid=(B,),
            in_specs=[
                pl.BlockSpec(memory_space=pltpu.MemorySpace.SMEM),      # conv taps
                pl.BlockSpec((None, C, Tp), lambda b: (b, 0, 0)),       # x block
            ],
            out_specs=pl.BlockSpec((None, C, Tp), lambda b: (b, 0, 0)),
            scratch_shapes=[pltpu.VMEM((C + 2 * pad, 1), jnp.float32)],
        ),
        compiler_params=pltpu.CompilerParams(
            dimension_semantics=("parallel",),
            vmem_limit_bytes=vmem_limit,
        ),
        cost_estimate=pl.CostEstimate(
            flops=3 * B * C * Tp,
            transcendentals=B * C,
            bytes_accessed=2 * B * C * Tp * itemsize,
        ),
    )(w, xp)

    return out if Tp == T else out[:, :, :T]


def eca_reference(x, w):
    # Pure-JAX reference of the PyTorch forward for correctness checking.
    ks = w.shape[0]
    pad = (ks - 1) // 2
    m = x.mean(axis=-1)                                  # (B, C)
    mp = jnp.pad(m, ((0, 0), (pad, pad)))
    conv = sum(w[k] * mp[:, k:k + m.shape[1]] for k in range(ks))
    return x * jax.nn.sigmoid(conv)[:, :, None]


if __name__ == "__main__":
    key = jax.random.PRNGKey(0)
    kx, kw = jax.random.split(key)

    B, C, T = 2, 16, 16
    KS = 5

    x = jax.random.normal(kx, (B, C, T), dtype=jnp.float32)

    # Conv1d(1, 1, 5, bias=False) weight has shape (1, 1, 5); deterministic init
    # mimicking PyTorch's default U(-1/sqrt(in_ch*K), 1/sqrt(in_ch*K)).
    bound = 1.0 / (1 * KS) ** 0.5
    w = jax.random.uniform(kw, (KS,), minval=-bound, maxval=bound, dtype=jnp.float32)

    out = jax.block_until_ready(eca_forward(x, w))
    ref = eca_reference(x, w)

    assert out.shape == x.shape and out.dtype == x.dtype
    assert jnp.allclose(out, ref, atol=1e-5, rtol=1e-5), "mismatch vs reference"
    print("KERNEL_OK")
</pallas_src>

<mosaic_0001>
module attributes {stable_mosaic.version = 11 : i64} {
  func.func @eca_kernel(%arg0: i32, %arg1: memref<5xf32, #tpu.memory_space<smem>>, %arg2: memref<1x16x128xf32, #tpu.memory_space<vmem>>, %arg3: memref<1x16x128xf32, #tpu.memory_space<vmem>>, %arg4: memref<20x1xf32, #tpu.memory_space<vmem>>) attributes {dimension_semantics = [#tpu.dimension_semantics<parallel>], iteration_bounds = array<i64: 2>, scalar_prefetch = 0 : i64, scratch_operands = 1 : i64, tpu.core_type = #tpu.core_type<tc>, window_params = [{transform_indices = @transform_0, window_bounds = array<i64: 5>}, {transform_indices = @transform_1, window_bounds = array<i64: 1, 16, 128>}, {transform_indices = @transform_2, window_bounds = array<i64: 1, 16, 128>}]} {
    %c0 = arith.constant 0 : index
    %c0_0 = arith.constant 0 : index
    %c0_1 = arith.constant 0 : index
    %0 = vector.load %arg2[%c0, %c0_0, %c0_1] : memref<1x16x128xf32, #tpu.memory_space<vmem>>, vector<1x16x128xf32>
    %1 = vector.shape_cast %0 : vector<1x16x128xf32> to vector<16x128xf32>
    %cst = arith.constant dense<0.000000e+00> : vector<16xf32>
    %2 = vector.multi_reduction <add>, %1, %cst [1] : vector<16x128xf32> to vector<16xf32>
    %3 = vector.shape_cast %2 : vector<16xf32> to vector<16x1xf32>
    %cst_2 = arith.constant 6.250000e-02 : f32
    %4 = vector.broadcast %cst_2 : f32 to vector<16x1xf32>
    %5 = arith.mulf %3, %4 : vector<16x1xf32>
    %cst_3 = arith.constant 0.000000e+00 : f32
    %6 = vector.broadcast %cst_3 : f32 to vector<20x1xf32>
    %c0_4 = arith.constant 0 : index
    %c0_5 = arith.constant 0 : index
    %7 = vector.load %arg4[%c0_4, %c0_5] : memref<20x1xf32, #tpu.memory_space<vmem>>, vector<20x1xf32>
    tpu.vector_store %arg4[%c0_4, %c0_5], %6 {strides = array<i32>} : memref<20x1xf32, #tpu.memory_space<vmem>>, vector<20x1xf32>,
    %c2 = arith.constant 2 : index
    %c0_6 = arith.constant 0 : index
    %8 = vector.load %arg4[%c2, %c0_6] : memref<20x1xf32, #tpu.memory_space<vmem>>, vector<16x1xf32>
    tpu.vector_store %arg4[%c2, %c0_6], %5 {strides = array<i32>} : memref<20x1xf32, #tpu.memory_space<vmem>>, vector<16x1xf32>,
    %cst_7 = arith.constant 0.000000e+00 : f32
    %9 = vector.broadcast %cst_7 : f32 to vector<16x1xf32>
    %c0_8 = arith.constant 0 : index
    %10 = memref.load %arg1[%c0_8] : memref<5xf32, #tpu.memory_space<smem>>
    %c0_9 = arith.constant 0 : index
    %c0_10 = arith.constant 0 : index
    %11 = vector.load %arg4[%c0_9, %c0_10] : memref<20x1xf32, #tpu.memory_space<vmem>>, vector<16x1xf32>
    %12 = vector.broadcast %10 : f32 to vector<16x1xf32>
    %13 = arith.mulf %12, %11 : vector<16x1xf32>
    %14 = arith.addf %9, %13 : vector<16x1xf32>
    %c1 = arith.constant 1 : index
    %15 = memref.load %arg1[%c1] : memref<5xf32, #tpu.memory_space<smem>>
    %c1_11 = arith.constant 1 : index
    %c0_12 = arith.constant 0 : index
    %16 = vector.load %arg4[%c1_11, %c0_12] : memref<20x1xf32, #tpu.memory_space<vmem>>, vector<16x1xf32>
    %17 = vector.broadcast %15 : f32 to vector<16x1xf32>
    %18 = arith.mulf %17, %16 : vector<16x1xf32>
    %19 = arith.addf %14, %18 : vector<16x1xf32>
    %c2_13 = arith.constant 2 : index
    %20 = memref.load %arg1[%c2_13] : memref<5xf32, #tpu.memory_space<smem>>
    %c2_14 = arith.constant 2 : index
    %c0_15 = arith.constant 0 : index
    %21 = vector.load %arg4[%c2_14, %c0_15] : memref<20x1xf32, #tpu.memory_space<vmem>>, vector<16x1xf32>
    %22 = vector.broadcast %20 : f32 to vector<16x1xf32>
    %23 = arith.mulf %22, %21 : vector<16x1xf32>
    %24 = arith.addf %19, %23 : vector<16x1xf32>
    %c3 = arith.constant 3 : index
    %25 = memref.load %arg1[%c3] : memref<5xf32, #tpu.memory_space<smem>>
    %c3_16 = arith.constant 3 : index
    %c0_17 = arith.constant 0 : index
    %26 = vector.load %arg4[%c3_16, %c0_17] : memref<20x1xf32, #tpu.memory_space<vmem>>, vector<16x1xf32>
    %27 = vector.broadcast %25 : f32 to vector<16x1xf32>
    %28 = arith.mulf %27, %26 : vector<16x1xf32>
    %29 = arith.addf %24, %28 : vector<16x1xf32>
    %c4 = arith.constant 4 : index
    %30 = memref.load %arg1[%c4] : memref<5xf32, #tpu.memory_space<smem>>
    %c4_18 = arith.constant 4 : index
    %c0_19 = arith.constant 0 : index
    %31 = vector.load %arg4[%c4_18, %c0_19] : memref<20x1xf32, #tpu.memory_space<vmem>>, vector<16x1xf32>
    %32 = vector.broadcast %30 : f32 to vector<16x1xf32>
    %33 = arith.mulf %32, %31 : vector<16x1xf32>
    %34 = arith.addf %29, %33 : vector<16x1xf32>
    %35 = arith.negf %34 : vector<16x1xf32>
    %36 = math.exp %35 : vector<16x1xf32>
    %cst_20 = arith.constant 1.000000e+00 : f32
    %37 = vector.broadcast %cst_20 : f32 to vector<16x1xf32>
    %38 = arith.addf %37, %36 : vector<16x1xf32>
    %39 = arith.divf %37, %38 : vector<16x1xf32>
    %c0_21 = arith.constant 0 : index
    %c0_22 = arith.constant 0 : index
    %c0_23 = arith.constant 0 : index
    %40 = vector.load %arg2[%c0_21, %c0_22, %c0_23] : memref<1x16x128xf32, #tpu.memory_space<vmem>>, vector<1x16x128xf32>
    %41 = vector.shape_cast %40 : vector<1x16x128xf32> to vector<16x128xf32>
    %42 = vector.broadcast %39 : vector<16x1xf32> to vector<16x128xf32>
    %43 = arith.mulf %41, %42 : vector<16x128xf32>
    %c0_24 = arith.constant 0 : index
    %c0_25 = arith.constant 0 : index
    %c0_26 = arith.constant 0 : index
    %44 = vector.load %arg3[%c0_24, %c0_25, %c0_26] : memref<1x16x128xf32, #tpu.memory_space<vmem>>, vector<1x16x128xf32>
    %45 = vector.shape_cast %44 : vector<1x16x128xf32> to vector<16x128xf32>
    %46 = vector.shape_cast %43 : vector<16x128xf32> to vector<1x16x128xf32>
    tpu.vector_store %arg3[%c0_24, %c0_25, %c0_26], %46 {strides = array<i32>} : memref<1x16x128xf32, #tpu.memory_space<vmem>>, vector<1x16x128xf32>,
    return
  }
  func.func @transform_0(%arg0: i32) -> i32 {
    %c0_i32 = arith.constant 0 : i32
    %c0_i32_0 = arith.constant 0 : i32
    return %c0_i32 : i32
  }
  func.func @transform_1(%arg0: i32) -> (i32, i32, i32) {
    %c0_i32 = arith.constant 0 : i32
    %c0_i32_0 = arith.constant 0 : i32
    %c0_i32_1 = arith.constant 0 : i32
    return %arg0, %c0_i32, %c0_i32_0 : i32, i32, i32
  }
  func.func @transform_2(%arg0: i32) -> (i32, i32, i32) {
    %c0_i32 = arith.constant 0 : i32
    %c0_i32_0 = arith.constant 0 : i32
    %c0_i32_1 = arith.constant 0 : i32
    return %arg0, %c0_i32, %c0_i32_0 : i32, i32, i32
  }
}

</mosaic_0001>

<llo_original>
// kernel: tpu_custom_call.1
$region0: #{tpu_custom_call.1}
  #allocation0 [shape = 'u32[]', space=smem, size = 0x4, offset = 0x4, fixed_abs, tag = 'smem constant byte address 0x4 - core index']
  #allocation1 [shape = 'u32[72,128]{1,0:T(1,128)}', space=vmem, size = 0x9000, scoped, tag = 'internal scratch']
  #allocation2 [shape = 'f32[20,1]{1,0:T(8,128)}', space=vmem, size = 0x3000, scoped, tag = 'scratch operand']
  %s0 = inlined_call_operand.hbm [shape: f32[5], index: 0, kind: input, shape index: {}]
  %s1 = inlined_call_operand.hbm [shape: f32[2,16,128], index: 1, kind: input, shape index: {}]
  %s2 = inlined_call_operand.hbm [shape: f32[2,16,128], index: 2, kind: output, shape index: {}]
  %s3 = sld [smem:[#allocation0]]
  $region49: #{tpu_custom_call.1} parent=0
    _
  %s5 = ssub.s32 1, %s3
  %s6 = scalar_select 0, %s5, %s3
  $region1: #{tpu_custom_call.1} parent=0
    #allocation3 [shape = 'u8[512]{0}', space=smem, size = 0x200, scoped, tag = 'input window, operand 0, single buffered']
    #allocation4 [shape = 's32[2]{0}', space=sflag, size = 0x8, scoped, tag = 'scoped memory for tpu_custom_call.1']
    #allocation5 [shape = 's32[2]{0}', space=sflag, size = 0x8, scoped, tag = 'scoped memory for tpu_custom_call.1']
    #allocation6 [shape = 's32[2]{0}', space=sflag, size = 0x8, scoped, tag = 'scoped memory for tpu_custom_call.1']
    #allocation7 [shape = 'u8[16384]{0}', space=vmem, size = 0x4000, scoped, tag = 'input window, operand 1']
    #allocation8 [shape = 'u8[16384]{0}', space=vmem, size = 0x4000, scoped, tag = 'output window, operand 0']
    %7 = vsyncpa [#allocation6], 0
    %8 = vsyncpa [#allocation4], 0
    %s9 = scalar_lea.sflag [#allocation4], 1
    %10 = vsyncpa %s9, 0
    %11 = vsyncpa [#allocation5], 0
    %s12 = scalar_lea.sflag [#allocation5], 1
    %13 = vsyncpa %s12, 0
    loop: start=0, step=1, limit=4
    $region2: #{tpu_custom_call.1} parent=1 // loop_pre_header
      _
    $region3: #{tpu_custom_call.1} parent=1 // loop_header
      %s15 = sphi 0, %s19
      %p16 = scmp.ge.s32.totalorder %s15, 4
      %s23 = sphi 0, %s23
      %s25 = sphi 0, %s23
      %s26 = sphi 0, %s25
      %s40 = sphi 0, %s26
      %s46 = sphi 0, %s48
      %s49 = sphi 0, %s46
      %s50 = sphi 0, %s49
      %s66 = sphi 0, %s50
      %s72 = sphi 0, %s74
      %s75 = sphi 0, %s72
      %s76 = sphi 0, %s75
      %s92 = sphi 0, %s76
    $region4: #{tpu_custom_call.1} parent=1 // loop_header_branch
      %18 = sbr.rel (%p16) target = $region8
    $region5: #{tpu_custom_call.1} parent=1 // loop_body
      %s20 = ssub.s32 %s15, 1
      %s21 = ssub.s32 %s15, 2
      %s22 = sadd.s32 %s15, 1
      %s24 = sadd.s32 %s23, 1
      %p27 = scmp.eq.s32.totalorder %s15, 1
      %p28 = scmp.ne.s32.totalorder %s23, %s25
      %p29 = scmp.eq.s32.totalorder %s15, 0
      %p30 = por %p28, %p29
      %p31 = scmp.ne.s32.totalorder %s23, %s25
      %p32 = scmp.eq.s32.totalorder %s20, 1
      %p33 = por %p31, %p32
      %p34 = scmp.ne.s32.totalorder %s25, %s26
      %p35 = scmp.eq.s32.totalorder %s20, 0
      %p36 = por %p34, %p35
      %p37 = scmp.ne.s32.totalorder %s25, %s26
      %p38 = scmp.eq.s32.totalorder %s21, 1
      %p39 = por %p37, %p38
      %p41 = scmp.ne.s32.totalorder %s26, %s40
      %p42 = scmp.eq.s32.totalorder %s21, 0
      %p43 = por %p41, %p42
      %s44 = ssub.s32 %s15, %s22
      %p45 = scmp.eq.s32.totalorder %s44, 0
      %s47 = sadd.s32 %s46, 1
      %s48 = scalar_select %p45, %s46, %s47
      %p51 = pneg %p45
      %p52 = scmp.eq.s32.totalorder %s15, 1
      %p53 = por %p51, %p52
      %p54 = scmp.ne.s32.totalorder %s46, %s49
      %p55 = scmp.eq.s32.totalorder %s15, 0
      %p56 = por %p54, %p55
      %p57 = scmp.ne.s32.totalorder %s46, %s49
      %p58 = scmp.eq.s32.totalorder %s20, 1
      %p59 = por %p57, %p58
      %p60 = scmp.ne.s32.totalorder %s49, %s50
      %p61 = scmp.eq.s32.totalorder %s20, 0
      %p62 = por %p60, %p61
      %p63 = scmp.ne.s32.totalorder %s49, %s50
      %p64 = scmp.eq.s32.totalorder %s21, 1
      %p65 = por %p63, %p64
      %p67 = scmp.ne.s32.totalorder %s50, %s66
      %p68 = scmp.eq.s32.totalorder %s21, 0
      %p69 = por %p67, %p68
      %s70 = ssub.s32 %s15, %s22
      %p71 = scmp.eq.s32.totalorder %s70, 0
      %s73 = sadd.s32 %s72, 1
      %s74 = scalar_select %p71, %s72, %s73
      %p77 = pneg %p71
      %p78 = scmp.eq.s32.totalorder %s15, 1
      %p79 = por %p77, %p78
      %p80 = scmp.ne.s32.totalorder %s72, %s75
      %p81 = scmp.eq.s32.totalorder %s15, 0
      %p82 = por %p80, %p81
      %p83 = scmp.ne.s32.totalorder %s72, %s75
      %p84 = scmp.eq.s32.totalorder %s20, 1
      %p85 = por %p83, %p84
      %p86 = scmp.ne.s32.totalorder %s75, %s76
      %p87 = scmp.eq.s32.totalorder %s20, 0
      %p88 = por %p86, %p87
      %p89 = scmp.ne.s32.totalorder %s75, %s76
      %p90 = scmp.eq.s32.totalorder %s21, 1
      %p91 = por %p89, %p90
      %p93 = scmp.ne.s32.totalorder %s76, %s92
      %p94 = scmp.eq.s32.totalorder %s21, 0
      %p95 = por %p93, %p94
      %p96 = scmp.le.s32.totalorder 1, %s15
      %p97 = scmp.lt.s32.totalorder %s15, 3
      %p98 = pnand %p96, %p97
      %p99 = pneg %p98
      // Predicated region
      $region9: #{tpu_custom_call.1} parent=5 // pred_check
        _
      $region10: #{tpu_custom_call.1} parent=5 // pred_check_branch
        %101 = sbr.rel (%p98) target = $region12
      $region11: #{tpu_custom_call.1} parent=5 // pred_region
        %s102 = ssub.s32 %s15, 1
        // Predicated region
        $region13: #{tpu_custom_call.1} parent=11 // pred_check
          %p103 = pneg %p36
        $region14: #{tpu_custom_call.1} parent=11 // pred_check_branch
          %105 = sbr.rel (%p103) target = $region16
        $region15: #{tpu_custom_call.1} parent=11 // pred_region
          %107 = vsyncadd [#allocation6], 0
          %s109 = sshll.u32 %s0, 4
          %s110 = int_to_ptr.hbm [resolvable:$true] %s109
          %112 = dma.hbm_to_smem %s110, 16, [#allocation3], [#allocation6]
        $region16: #{tpu_custom_call.1} parent=11 // pred_fallthru
          _
      $region12: #{tpu_custom_call.1} parent=5 // pred_fallthru
        _
      %p113 = scmp.lt.s32.totalorder %s15, 2
      // Predicated region
      $region17: #{tpu_custom_call.1} parent=5 // pred_check
        %p114 = pneg %p113
      $region18: #{tpu_custom_call.1} parent=5 // pred_check_branch
        %116 = sbr.rel (%p114) target = $region20
      $region19: #{tpu_custom_call.1} parent=5 // pred_region
        // Predicated region
        $region21: #{tpu_custom_call.1} parent=19 // pred_check
          %p117 = pneg %p56
        $region22: #{tpu_custom_call.1} parent=19 // pred_check_branch
          %119 = sbr.rel (%p117) target = $region24
        $region23: #{tpu_custom_call.1} parent=19 // pred_region
          %s120 = sand.u32 %s46, 1
          %s121 = scalar_lea.sflag [#allocation4], %s120
          %s122 = sand.u32 %s46, 1
          %s123 = smul.addr %s122, 16
          %s124 = scalar_lea.vmem [#allocation7], %s123
          %126 = vsyncadd %s121, 0
          %s127 = smul.addr %s15, 2
          %s128 = smul.addr %s127, 8
          %s129 = scalar_lea.hbm %s1, %s128
          %s130 = sshll.u32 %s129, 4
          %s131 = int_to_ptr.hbm [resolvable:$true] %s130
          %s132 = sshll.u32 %s124, 4
          %s133 = int_to_ptr.vmem [resolvable:$true] %s132
          %138 = dma.hbm_to_vmem [thread:$0]  %s131, 256, %s133, %s121, 128, 128, 8
        $region24: #{tpu_custom_call.1} parent=19 // pred_fallthru
          _
      $region20: #{tpu_custom_call.1} parent=5 // pred_fallthru
        _
      %p139 = scmp.le.s32.totalorder 1, %s15
      %p140 = scmp.lt.s32.totalorder %s15, 3
      %p141 = pnand %p139, %p140
      %p142 = pneg %p141
      // Predicated region
      $region25: #{tpu_custom_call.1} parent=5 // pred_check
        _
      $region26: #{tpu_custom_call.1} parent=5 // pred_check_branch
        %144 = sbr.rel (%p141) target = $region28
      $region27: #{tpu_custom_call.1} parent=5 // pred_region
        %s145 = ssub.s32 %s15, 1
        // Predicated region
        $region29: #{tpu_custom_call.1} parent=27 // pred_check
          %p146 = pneg %p36
        $region30: #{tpu_custom_call.1} parent=27 // pred_check_branch
          %148 = sbr.rel (%p146) target = $region32
        $region31: #{tpu_custom_call.1} parent=27 // pred_region
          %150 = dma.done [#allocation6], 16
        $region32: #{tpu_custom_call.1} parent=27 // pred_fallthru
          _
        %s151 = sand.u32 %s49, 1
        %s152 = scalar_lea.sflag [#allocation4], %s151
        %s153 = sand.u32 %s49, 1
        %s154 = smul.addr %s153, 16
        %s155 = scalar_lea.vmem [#allocation7], %s154
        // Predicated region
        $region33: #{tpu_custom_call.1} parent=27 // pred_check
          %p156 = pneg %p62
        $region34: #{tpu_custom_call.1} parent=27 // pred_check_branch
          %158 = sbr.rel (%p156) target = $region36
        $region35: #{tpu_custom_call.1} parent=27 // pred_region
          %160 = dma.done %s152, 256
        $region36: #{tpu_custom_call.1} parent=27 // pred_fallthru
          _
        %161 = sfence
        %p162 = pneg %p36
        %p163 = pneg %p33
        %s164 = sand.u32 %s49, 1
        %s165 = scalar_lea.sflag [#allocation4], %s164
        %s166 = sand.u32 %s49, 1
        %s167 = smul.addr %s166, 16
        %s168 = scalar_lea.vmem [#allocation7], %s167
        %p169 = pneg %p62
        %p170 = pneg %p59
        %p171 = pneg %p88
        %p172 = pneg %p85
        %s173 = sand.u32 %s75, 1
        %s174 = scalar_lea.sflag [#allocation5], %s173
        %s175 = sand.u32 %s75, 1
        %s176 = smul.addr %s175, 16
        %s177 = scalar_lea.vmem [#allocation8], %s176
        %v178 = vld [vmem:[%s155] sm:$0xff]
        %v179 = vld [vmem:[%s155 + $0x8] sm:$0xff]
        %180 = vadd.xlane.f32.xlu0 %v178
        %v181 = vpop.xlane.xlu0 %180
        %182 = vadd.xlane.f32.xlu0 %v179
        %v183 = vpop.xlane.xlu0 %182
        %v184 = vmul.f32 %v181, 0.0625
        %v185 = vmul.f32 %v183, 0.0625
        %vm186 = vcmask 7168
        %187 = vst.msk [vmem:[#allocation2] sm:$0xff] %vm186, 0.0
        %188 = vst.msk [vmem:[#allocation2 + $0x8] sm:$0xff] %vm186, 0.0
        %vm189 = vcmask 3072
        %190 = vst.msk [vmem:[#allocation2 + $0x10] sm:$0xf] %vm189, 0.0
        %191 = vst.msk [vmem:[#allocation2 + $0x2] sm:$0xff] %vm186, %v184
        %192 = vst.msk [vmem:[#allocation2 + $0xa] sm:$0xff] %vm186, %v185
        %s193 = sld [smem:[#allocation3]]
        %v194 = vld [vmem:[#allocation2] sm:$0xff]
        %v195 = vld [vmem:[#allocation2 + $0x8] sm:$0xff]
        %v196 = vstv %s193
        %v197 = vmul.f32 %v196, %v194
        %v198 = vmul.f32 %v196, %v195
        %v199 = vadd.f32 %v197, 0.0
        %v200 = vadd.f32 %v198, 0.0
        %s201 = sld [smem:[#allocation3 + $0x1]]
        %v202 = vld [vmem:[#allocation2 + $0x1] sm:$0xff]
        %v203 = vld [vmem:[#allocation2 + $0x9] sm:$0xff]
        %v204 = vstv %s201
        %v205 = vmul.f32 %v204, %v202
        %v206 = vmul.f32 %v204, %v203
        %v207 = vadd.f32 %v199, %v205
        %v208 = vadd.f32 %v200, %v206
        %s209 = sld [smem:[#allocation3 + $0x2]]
        %v210 = vld [vmem:[#allocation2 + $0x2] sm:$0xff]
        %v211 = vld [vmem:[#allocation2 + $0xa] sm:$0xff]
        %v212 = vstv %s209
        %v213 = vmul.f32 %v212, %v210
        %v214 = vmul.f32 %v212, %v211
        %v215 = vadd.f32 %v207, %v213
        %v216 = vadd.f32 %v208, %v214
        %s217 = sld [smem:[#allocation3 + $0x3]]
        %v218 = vld [vmem:[#allocation2 + $0x3] sm:$0xff]
        %v219 = vld [vmem:[#allocation2 + $0xb] sm:$0xff]
        %v220 = vstv %s217
        %v221 = vmul.f32 %v220, %v218
        %v222 = vmul.f32 %v220, %v219
        %v223 = vadd.f32 %v215, %v221
        %v224 = vadd.f32 %v216, %v222
        %s225 = sld [smem:[#allocation3 + $0x4]]
        %v226 = vld [vmem:[#allocation2 + $0x4] sm:$0xff]
        %v227 = vld [vmem:[#allocation2 + $0xc] sm:$0xff]
        %v228 = vstv %s225
        %v229 = vmul.f32 %v228, %v226
        %v230 = vmul.f32 %v228, %v227
        %v231 = vadd.f32 %v223, %v229
        %v232 = vadd.f32 %v224, %v230
        %v233 = vxor.u32 %v231, 2147483648
        %v234 = vxor.u32 %v232, 2147483648
        %v235 = vmul.f32 %v233, 1.442695
        %v236 = vpow.pop %v235
        %v237 = vmul.f32 %v234, 1.442695
        %v238 = vpow.pop %v237
        %v239 = vadd.f32 %v236, 1.0
        %v240 = vadd.f32 %v238, 1.0
        %v241 = vrcp.pop %v239
        %v242 = vmul.f32 %v239, %v241
        %v243 = vsub.f32 1.0, %v242
        %v244 = vmul.f32 %v241, %v243
        %v245 = vadd.f32 %v241, %v244
        %vm246 = vweird.f32 %v239
        %vm247 = vweird.f32 %v241
        %vm248 = vmor %vm246, %vm247
        %v249 = vsel %vm248, %v241, %v245
        %v250 = vand.u32 2147483647, %v239
        %vm251 = vcmp.eq.f32.partialorder %v250, 8.507059e+37
        %v252 = vand.u32 %v239, 2147483648
        %v253 = vor.u32 1.1754944e-38, %v252
        %v254 = vsel %vm251, %v253, %v249
        %v255 = vmul.f32 1.0, %v254
        %v256 = vrcp.pop %v240
        %v257 = vmul.f32 %v240, %v256
        %v258 = vsub.f32 1.0, %v257
        %v259 = vmul.f32 %v256, %v258
        %v260 = vadd.f32 %v256, %v259
        %vm261 = vweird.f32 %v240
        %vm262 = vweird.f32 %v256
        %vm263 = vmor %vm261, %vm262
        %v264 = vsel %vm263, %v256, %v260
        %v265 = vand.u32 2147483647, %v240
        %vm266 = vcmp.eq.f32.partialorder %v265, 8.507059e+37
        %v267 = vand.u32 %v240, 2147483648
        %v268 = vor.u32 1.1754944e-38, %v267
        %v269 = vsel %vm266, %v268, %v264
        %v270 = vmul.f32 1.0, %v269
        %v271 = vld [vmem:[%s155] sm:$0xff]
        %v272 = vld [vmem:[%s155 + $0x8] sm:$0xff]
        %274 = vset.pattern.permute.xlu0 0
        %275 = vperm.xlu0 %274, %v255
        %v276 = vpop.permute.xlu0 %275
        %279 = vset.pattern.permute.xlu0 0
        %280 = vperm.xlu0 %279, %v270
        %v281 = vpop.permute.xlu0 %280
        %v283 = vmul.f32 %v271, %v276
        %v284 = vmul.f32 %v272, %v281
        %285 = vst [vmem:[%s177] sm:$0xff] %v283
        %286 = vst [vmem:[%s177 + $0x8] sm:$0xff] %v284
        %s287 = sand.u32 %s75, 1
        %s288 = scalar_lea.sflag [#allocation5], %s287
        %s289 = sand.u32 %s75, 1
        %s290 = smul.addr %s289, 16
        %s291 = scalar_lea.vmem [#allocation8], %s290
        // Predicated region
        $region37: #{tpu_custom_call.1} parent=27 // pred_check
          %p292 = pneg %p85
        $region38: #{tpu_custom_call.1} parent=27 // pred_check_branch
          %294 = sbr.rel (%p292) target = $region40
        $region39: #{tpu_custom_call.1} parent=27 // pred_region
          %296 = vsyncadd %s288, 0
          %s297 = smul.addr %s20, 2
          %s298 = smul.addr %s297, 8
          %s299 = scalar_lea.hbm %s2, %s298
          %s300 = sshll.u32 %s291, 4
          %s301 = int_to_ptr.vmem [resolvable:$true] %s300
          %s302 = sshll.u32 %s299, 4
          %s303 = int_to_ptr.hbm [resolvable:$true] %s302
          %308 = dma.vmem_to_hbm [thread:$0]  %s301, 256, %s303, %s288, 128, 128, 8
        $region40: #{tpu_custom_call.1} parent=27 // pred_fallthru
          _
      $region28: #{tpu_custom_call.1} parent=5 // pred_fallthru
        _
      %p309 = scmp.le.s32.totalorder 2, %s15
      // Predicated region
      $region41: #{tpu_custom_call.1} parent=5 // pred_check
        %p310 = pneg %p309
      $region42: #{tpu_custom_call.1} parent=5 // pred_check_branch
        %312 = sbr.rel (%p310) target = $region44
      $region43: #{tpu_custom_call.1} parent=5 // pred_region
        %s313 = ssub.s32 %s15, 2
        // Predicated region
        $region45: #{tpu_custom_call.1} parent=43 // pred_check
          %p314 = pneg %p91
        $region46: #{tpu_custom_call.1} parent=43 // pred_check_branch
          %316 = sbr.rel (%p314) target = $region48
        $region47: #{tpu_custom_call.1} parent=43 // pred_region
          %s317 = sand.u32 %s76, 1
          %s318 = scalar_lea.sflag [#allocation5], %s317
          %s319 = sand.u32 %s76, 1
          %s320 = smul.addr %s319, 16
          %s321 = scalar_lea.vmem [#allocation8], %s320
          %323 = dma.done %s318, 256
        $region48: #{tpu_custom_call.1} parent=43 // pred_fallthru
          _
      $region44: #{tpu_custom_call.1} parent=5 // pred_fallthru
        _
    $region6: #{tpu_custom_call.1} parent=1 // loop_footer
      %s19 = sadd.s32 1, %s15
    $region7: #{tpu_custom_call.1} parent=1 // loop_footer_branch
      %14 = sbr.rel target = $region3
    $region8: #{tpu_custom_call.1} parent=1 // loop_exit
      _
    %324 = vsyncpa [#allocation4], 1
    %s325 = scalar_lea.sflag [#allocation4], 1
    %326 = vsyncpa %s325, 1
    %327 = vsyncpa [#allocation5], 1
    %s328 = scalar_lea.sflag [#allocation5], 1
    %329 = vsyncpa %s328, 1
    %330 = vsyncpa [#allocation6], 1
    %s331 = scalar_lea.sflag [#allocation6], 1
    %332 = vsyncpa %s331, 1

</llo_original>
